<compile_context>
chip_gen: v7x
topology: tpu7x:2x2x1
jax: 0.10.0
libtpu: 0.0.40
codegen_flags: <defaults>
</compile_context>

<pallas_src>
import math
from functools import partial

import jax
import jax.numpy as jnp
from jax.experimental import pallas as pl
from jax.experimental.pallas import tpu as pltpu


# ---------------------------------------------------------------------------
# Base functions (mirror the PyTorch module's self.base_funcs, in order).
# SiLU and sigmoid(x)*x are mathematically identical -- that duplication is
# present in the original module and preserved here.
# ---------------------------------------------------------------------------
def _silu(x):
    return x * jax.nn.sigmoid(x)


def _relu6(x):
    return jnp.clip(x, 0.0, 6.0)


def _sigmoid_mul(x):
    return jax.nn.sigmoid(x) * x


def _gelu_tanh(x):
    c = math.sqrt(2.0 / math.pi)
    return 0.5 * x * (1.0 + jnp.tanh(c * (x + 0.044715 * (x ** 3))))


BASE_FUNCS = [jnp.sin, jnp.cos, jnp.tanh, _silu, _relu6, _sigmoid_mul, _gelu_tanh]


def _round_up(n, m):
    return ((n + m - 1) // m) * m


def _cdiv(a, b):
    return -(-a // b)


def _term_dtype_for_device():
    """bf16 elementwise/transcendental path exists on v6e/v7x, not v5e."""
    kind = jax.devices()[0].device_kind.lower()
    if ("v6" in kind) or ("v7" in kind):
        return jnp.bfloat16
    return jnp.float32


# ---------------------------------------------------------------------------
# Kernel: one batch tile through the whole forward pass.
# ---------------------------------------------------------------------------
def dynamic_math_kernel(x_ref, w_in_ref, b_in_ref, gamma_ref, beta_ref,
                        coeffs_ref, exps_ref, w_out_ref, b_out_ref, out_ref,
                        *, complexity, true_internal_dim, int_pad,
                        term_dtype, clip_lower):
    x = x_ref[...]                                                   # [TB, IN_PAD] f32

    # input_layer: bf16 MXU matmul, f32 accumulation.  Padded columns of the
    # weight and padded bias lanes are zero, so padded lanes of h are exactly 0.
    h = jnp.dot(x.astype(jnp.bfloat16), w_in_ref[...],
                preferred_element_type=jnp.float32)
    h = h + b_in_ref[...]                                            # [TB, INT_PAD]

    # LayerNorm over the TRUE internal_dim (biased variance, eps=1e-5).
    # Padded lanes of h are 0 -> plain sum equals the true sum.  For the
    # variance, each padded lane contributes exactly mean^2 to sum(diff^2),
    # so subtract that closed-form correction (no iota / mask / where).
    n = float(true_internal_dim)
    n_pad_extra = float(int_pad - true_internal_dim)
    mean = jnp.sum(h, axis=-1, keepdims=True) / n
    diff = h - mean
    ssq = jnp.sum(diff * diff, axis=-1, keepdims=True)
    var = (ssq - n_pad_extra * (mean * mean)) / n
    h = diff * jax.lax.rsqrt(var + 1e-5)
    # gamma/beta are zero-padded -> padded lanes become 0 again here.
    h = h * gamma_ref[...] + beta_ref[...]

    # relu
    h = jnp.maximum(h, 0.0)

    # Dynamic-term accumulation (hot loop).  Runs in term_dtype (bf16 on
    # v6e/v7x, f32 on v5e); only the accumulator stays f32.  Table rows are
    # loaded straight from the refs (vld path) each term.
    ht = h.astype(term_dtype)
    dyn = jnp.zeros(h.shape, jnp.float32)
    for i in range(complexity):
        func = BASE_FUNCS[i % len(BASE_FUNCS)]
        ti = ht * exps_ref[i]                                        # (TB,INT)*(1,INT)
        if clip_lower:
            ti = jnp.clip(ti, -10.0, 10.0)
        else:
            # h >= 0 and every exponent >= 0 -> lower clamp is dead.
            ti = jnp.minimum(ti, 10.0)
        # ti is bounded and coeffs are sanitized in the wrapper, so every term
        # is finite -> the original per-term nan_to_num is a no-op (omitted).
        dyn = dyn + (coeffs_ref[i] * func(ti)).astype(jnp.float32)

    # output_layer + clamp (bf16 MXU matmul, f32 accumulation).
    out = jnp.dot(dyn.astype(jnp.bfloat16), w_out_ref[...],
                  preferred_element_type=jnp.float32)
    out = out + b_out_ref[...]
    out_ref[...] = jnp.clip(out, -100.0, 100.0)


# ---------------------------------------------------------------------------
# Parameter init (mirrors the PyTorch module's initialization).
# ---------------------------------------------------------------------------
def init_params(key, input_dim, output_dim, complexity):
    internal_dim = max(output_dim, complexity, input_dim // 2 + 1)
    k_win, k_wout, k_coef, k_exp = jax.random.split(key, 4)

    lim_in = math.sqrt(6.0 / (input_dim + internal_dim))
    w_in = jax.random.uniform(k_win, (internal_dim, input_dim),
                              minval=-lim_in, maxval=lim_in, dtype=jnp.float32)
    lim_out = math.sqrt(6.0 / (internal_dim + output_dim))
    w_out = jax.random.uniform(k_wout, (output_dim, internal_dim),
                               minval=-lim_out, maxval=lim_out, dtype=jnp.float32)

    raw = dict(
        w_in=w_in,                                                   # [internal, in]
        b_in=jnp.zeros((internal_dim,), jnp.float32),
        gamma=jnp.ones((internal_dim,), jnp.float32),
        beta=jnp.zeros((internal_dim,), jnp.float32),
        coeffs=jax.random.normal(k_coef, (internal_dim, complexity),
                                 dtype=jnp.float32) * 0.05,
        exps=jax.random.uniform(k_exp, (internal_dim, complexity),
                                dtype=jnp.float32) * 1.5 + 0.25,
        w_out=w_out,                                                 # [out, internal]
        b_out=jnp.zeros((output_dim,), jnp.float32),
    )
    return raw, internal_dim


# ---------------------------------------------------------------------------
# Pack params: transpose, zero-pad to lane multiples of 128, sanitize tables
# once, cast matmul weights to bf16 and tables to the term dtype.
# ---------------------------------------------------------------------------
def pack_params(raw, input_dim, output_dim, complexity, internal_dim, term_dtype):
    IN_PAD = _round_up(input_dim, 128)
    INT_PAD = _round_up(internal_dim, 128)
    OUT_PAD = _round_up(output_dim, 128)

    w_in_t = jnp.zeros((IN_PAD, INT_PAD), jnp.float32)
    w_in_t = w_in_t.at[:input_dim, :internal_dim].set(raw["w_in"].T)
    w_out_t = jnp.zeros((INT_PAD, OUT_PAD), jnp.float32)
    w_out_t = w_out_t.at[:internal_dim, :output_dim].set(raw["w_out"].T)

    b_in = jnp.zeros((1, INT_PAD), jnp.float32).at[0, :internal_dim].set(raw["b_in"])
    gamma = jnp.zeros((1, INT_PAD), jnp.float32).at[0, :internal_dim].set(raw["gamma"])
    beta = jnp.zeros((1, INT_PAD), jnp.float32).at[0, :internal_dim].set(raw["beta"])
    b_out = jnp.zeros((1, OUT_PAD), jnp.float32).at[0, :output_dim].set(raw["b_out"])

    # Sanitize once (replaces the per-term nan_to_num inside the kernel loop).
    coeffs = jnp.nan_to_num(raw["coeffs"], nan=0.0, posinf=1.0e4, neginf=-1.0e4)
    exps = jnp.nan_to_num(raw["exps"], nan=0.0, posinf=1.0e4, neginf=-1.0e4)

    # (complexity, 1, INT_PAD): row i is loaded as a (1, INT_PAD) broadcastable
    # block straight from the ref inside the kernel.
    coeffs_t = jnp.zeros((complexity, 1, INT_PAD), jnp.float32)
    coeffs_t = coeffs_t.at[:, 0, :internal_dim].set(coeffs.T)
    exps_t = jnp.zeros((complexity, 1, INT_PAD), jnp.float32)
    exps_t = exps_t.at[:, 0, :internal_dim].set(exps.T)

    # Lower clamp of the term input is only dead if every exponent is >= 0
    # (h >= 0 after ReLU).  Decide statically here; with the module's init
    # (rand*1.5 + 0.25) this is always True.
    exps_nonneg = bool(jnp.all(exps >= 0.0))

    packed = dict(
        w_in_t=w_in_t.astype(jnp.bfloat16),                          # [IN_PAD, INT_PAD]
        b_in=b_in, gamma=gamma, beta=beta,
        coeffs_t=coeffs_t.astype(term_dtype),                        # [C, 1, INT_PAD]
        exps_t=exps_t.astype(term_dtype),                            # [C, 1, INT_PAD]
        w_out_t=w_out_t.astype(jnp.bfloat16),                        # [INT_PAD, OUT_PAD]
        b_out=b_out,
    )
    return packed, exps_nonneg


def _vmem_limit_bytes(tile_b, in_pad, int_pad, out_pad, complexity, term_bytes):
    resident = 2 * (in_pad * int_pad + int_pad * out_pad)            # bf16 weights
    resident += 4 * (3 * int_pad + out_pad)                          # f32 biases / ln
    resident += 2 * term_bytes * complexity * int_pad                # coeff / exp tables
    streamed = 2 * 4 * tile_b * (in_pad + out_pad)                   # double-buffered x/out
    live = 8 * 4 * tile_b * int_pad                                  # h / dyn / temporaries
    budget = 2 * (resident + streamed + live)
    # No artificial high floor; cap below v7x's 64 MiB physical VMEM.
    return int(min(max(budget, 16 * 1024 * 1024), 48 * 1024 * 1024))


# ---------------------------------------------------------------------------
# Wrapper: pad x (only if needed), build grid/BlockSpecs, call the kernel,
# slice padding off.
# ---------------------------------------------------------------------------
def dynamic_math_unit(x, packed, *, complexity, internal_dim, output_dim,
                      clip_lower=True):
    B, input_dim = x.shape
    IN_PAD, INT_PAD = packed["w_in_t"].shape
    OUT_PAD = packed["w_out_t"].shape[1]
    term_dtype = packed["coeffs_t"].dtype
    term_bytes = jnp.dtype(term_dtype).itemsize

    # Balanced batch tiles: avoid the near-2x padding waste of fixed 512-row
    # tiles on unlucky B, and give v7x's two TensorCores >=2 tiles when there
    # is enough work.
    TILE_B_MAX = 1024
    min_tiles = 2 if B >= 16 else 1
    num_tiles = max(_cdiv(B, TILE_B_MAX), min_tiles)
    tile_b = _round_up(_cdiv(B, num_tiles), 8)
    B_rows = _round_up(B, tile_b)
    num_tiles = B_rows // tile_b

    if B_rows == B and IN_PAD == input_dim:
        x_p = x.astype(jnp.float32)                                  # already aligned
    else:
        x_p = jnp.zeros((B_rows, IN_PAD), jnp.float32).at[:B, :input_dim].set(x)

    kernel = partial(dynamic_math_kernel,
                     complexity=complexity, true_internal_dim=internal_dim,
                     int_pad=INT_PAD, term_dtype=term_dtype,
                     clip_lower=clip_lower)

    flops = (2 * B_rows * (IN_PAD * INT_PAD + INT_PAD * OUT_PAD)
             + 12 * B_rows * INT_PAD * complexity)
    transcendentals = B_rows * INT_PAD * complexity
    bytes_accessed = (4 * B_rows * (IN_PAD + OUT_PAD)
                      + 2 * (IN_PAD * INT_PAD + INT_PAD * OUT_PAD)
                      + term_bytes * 2 * complexity * INT_PAD
                      + 4 * (3 * INT_PAD + OUT_PAD))

    out_p = pl.pallas_call(
        kernel,
        out_shape=jax.ShapeDtypeStruct((B_rows, OUT_PAD), jnp.float32),
        grid=(num_tiles,),
        in_specs=[
            pl.BlockSpec((tile_b, IN_PAD), lambda i: (i, 0)),        # x (streamed)
            pl.BlockSpec((IN_PAD, INT_PAD), lambda i: (0, 0)),       # w_in (resident)
            pl.BlockSpec((1, INT_PAD), lambda i: (0, 0)),            # b_in
            pl.BlockSpec((1, INT_PAD), lambda i: (0, 0)),            # gamma
            pl.BlockSpec((1, INT_PAD), lambda i: (0, 0)),            # beta
            pl.BlockSpec((complexity, 1, INT_PAD), lambda i: (0, 0, 0)),  # coeffs
            pl.BlockSpec((complexity, 1, INT_PAD), lambda i: (0, 0, 0)),  # exps
            pl.BlockSpec((INT_PAD, OUT_PAD), lambda i: (0, 0)),      # w_out
            pl.BlockSpec((1, OUT_PAD), lambda i: (0, 0)),            # b_out
        ],
        out_specs=pl.BlockSpec((tile_b, OUT_PAD), lambda i: (i, 0)),
        compiler_params=pltpu.CompilerParams(
            dimension_semantics=("parallel",),
            vmem_limit_bytes=_vmem_limit_bytes(tile_b, IN_PAD, INT_PAD, OUT_PAD,
                                               complexity, term_bytes),
        ),
        cost_estimate=pl.CostEstimate(flops=flops,
                                      transcendentals=transcendentals,
                                      bytes_accessed=bytes_accessed),
    )(x_p, packed["w_in_t"], packed["b_in"], packed["gamma"], packed["beta"],
      packed["coeffs_t"], packed["exps_t"], packed["w_out_t"], packed["b_out"])

    return out_p[:B, :output_dim]


# ---------------------------------------------------------------------------
# Pure-JAX reference (same bf16 matmul / term-dtype path as the kernel).
# ---------------------------------------------------------------------------
def reference(x, packed, input_dim, internal_dim, output_dim, complexity,
              term_dtype, clip_lower):
    w_in = packed["w_in_t"][:input_dim, :internal_dim]
    w_out = packed["w_out_t"][:internal_dim, :output_dim]
    h = jnp.dot(x.astype(jnp.bfloat16), w_in, preferred_element_type=jnp.float32)
    h = h + packed["b_in"][:, :internal_dim]
    mean = jnp.mean(h, axis=-1, keepdims=True)
    diff = h - mean
    var = jnp.mean(diff * diff, axis=-1, keepdims=True)
    h = diff * jax.lax.rsqrt(var + 1e-5)
    h = h * packed["gamma"][:, :internal_dim] + packed["beta"][:, :internal_dim]
    h = jnp.maximum(h, 0.0)
    ht = h.astype(term_dtype)
    dyn = jnp.zeros(h.shape, jnp.float32)
    for i in range(complexity):
        func = BASE_FUNCS[i % len(BASE_FUNCS)]
        coeff_i = packed["coeffs_t"][i, 0, :internal_dim][None, :]
        exp_i = packed["exps_t"][i, 0, :internal_dim][None, :]
        ti = ht * exp_i
        ti = jnp.clip(ti, -10.0, 10.0) if clip_lower else jnp.minimum(ti, 10.0)
        term = (coeff_i * func(ti)).astype(jnp.float32)
        term = jnp.nan_to_num(term, nan=0.0, posinf=1.0e4, neginf=-1.0e4)
        dyn = dyn + term
    out = jnp.dot(dyn.astype(jnp.bfloat16), w_out, preferred_element_type=jnp.float32)
    out = out + packed["b_out"][:, :output_dim]
    return jnp.clip(out, -100.0, 100.0)


if __name__ == "__main__":
    input_dim, output_dim, complexity = 16, 8, 5
    batch = 2

    key = jax.random.PRNGKey(0)
    k_param, k_x = jax.random.split(key)
    raw, internal_dim = init_params(k_param, input_dim, output_dim, complexity)

    term_dtype = _term_dtype_for_device()                            # bf16 on v6e/v7x
    packed, exps_nonneg = pack_params(raw, input_dim, output_dim, complexity,
                                      internal_dim, term_dtype)
    clip_lower = not exps_nonneg

    x = jax.random.normal(k_x, (batch, input_dim), dtype=jnp.float32)

    out = dynamic_math_unit(x, packed, complexity=complexity,
                            internal_dim=internal_dim, output_dim=output_dim,
                            clip_lower=clip_lower)
    out = jax.block_until_ready(out)

    ref = reference(x, packed, input_dim, internal_dim, output_dim, complexity,
                    term_dtype, clip_lower)
    assert out.shape == (batch, output_dim)
    max_err = float(jnp.max(jnp.abs(out - ref)))
    tol = 2e-2 if term_dtype == jnp.bfloat16 else 2e-3
    assert jnp.allclose(out, ref, atol=tol, rtol=tol), max_err

    print("KERNEL_OK")
</pallas_src>

<mosaic_0001>
module attributes {stable_mosaic.version = 11 : i64} {
  func.func @dynamic_math_kernel(%arg0: i32, %arg1: memref<8x128xf32, #tpu.memory_space<vmem>>, %arg2: memref<128x128xbf16, #tpu.memory_space<vmem>>, %arg3: memref<1x128xf32, #tpu.memory_space<vmem>>, %arg4: memref<1x128xf32, #tpu.memory_space<vmem>>, %arg5: memref<1x128xf32, #tpu.memory_space<vmem>>, %arg6: memref<5x1x128xf32, #tpu.memory_space<vmem>>, %arg7: memref<5x1x128xf32, #tpu.memory_space<vmem>>, %arg8: memref<128x128xbf16, #tpu.memory_space<vmem>>, %arg9: memref<1x128xf32, #tpu.memory_space<vmem>>, %arg10: memref<8x128xf32, #tpu.memory_space<vmem>>) attributes {dimension_semantics = [#tpu.dimension_semantics<parallel>], iteration_bounds = array<i64: 1>, scalar_prefetch = 0 : i64, scratch_operands = 0 : i64, tpu.core_type = #tpu.core_type<tc>, window_params = [{transform_indices = @transform_0, window_bounds = array<i64: 8, 128>}, {pipeline_mode = #tpu.pipeline_mode<synchronous>, transform_indices = @transform_1, window_bounds = array<i64: 128, 128>}, {pipeline_mode = #tpu.pipeline_mode<synchronous>, transform_indices = @transform_2, window_bounds = array<i64: 1, 128>}, {pipeline_mode = #tpu.pipeline_mode<synchronous>, transform_indices = @transform_3, window_bounds = array<i64: 1, 128>}, {pipeline_mode = #tpu.pipeline_mode<synchronous>, transform_indices = @transform_4, window_bounds = array<i64: 1, 128>}, {pipeline_mode = #tpu.pipeline_mode<synchronous>, transform_indices = @transform_5, window_bounds = array<i64: 5, 1, 128>}, {pipeline_mode = #tpu.pipeline_mode<synchronous>, transform_indices = @transform_6, window_bounds = array<i64: 5, 1, 128>}, {pipeline_mode = #tpu.pipeline_mode<synchronous>, transform_indices = @transform_7, window_bounds = array<i64: 128, 128>}, {pipeline_mode = #tpu.pipeline_mode<synchronous>, transform_indices = @transform_8, window_bounds = array<i64: 1, 128>}, {transform_indices = @transform_9, window_bounds = array<i64: 8, 128>}]} {
    %c0 = arith.constant 0 : index
    %c0_0 = arith.constant 0 : index
    %0 = vector.load %arg1[%c0, %c0_0] : memref<8x128xf32, #tpu.memory_space<vmem>>, vector<8x128xf32>
    %1 = arith.truncf %0 : vector<8x128xf32> to vector<8x128xbf16>
    %c0_1 = arith.constant 0 : index
    %c0_2 = arith.constant 0 : index
    %2 = vector.load %arg2[%c0_1, %c0_2] : memref<128x128xbf16, #tpu.memory_space<vmem>>, vector<128x128xbf16>
    %cst = arith.constant dense<0.000000e+00> : vector<8x128xf32>
    %3 = tpu.matmul %1, %2, %cst {dimension_numbers = #tpu.dot_dimension_numbers<[1], [0], [0], [1], [0, 0, 1, 1], [], []>} : vector<8x128xbf16>, vector<128x128xbf16>, vector<8x128xf32> -> vector<8x128xf32>
    %c0_3 = arith.constant 0 : index
    %c0_4 = arith.constant 0 : index
    %4 = vector.load %arg3[%c0_3, %c0_4] : memref<1x128xf32, #tpu.memory_space<vmem>>, vector<1x128xf32>
    %5 = vector.broadcast %4 : vector<1x128xf32> to vector<8x128xf32>
    %6 = arith.addf %3, %5 : vector<8x128xf32>
    %cst_5 = arith.constant dense<0.000000e+00> : vector<8xf32>
    %7 = vector.multi_reduction <add>, %6, %cst_5 [1] : vector<8x128xf32> to vector<8xf32>
    %8 = vector.shape_cast %7 : vector<8xf32> to vector<8x1xf32>
    %cst_6 = arith.constant 9.000000e+00 : f32
    %9 = vector.broadcast %cst_6 : f32 to vector<8x1xf32>
    %10 = arith.divf %8, %9 : vector<8x1xf32>
    %11 = vector.broadcast %10 : vector<8x1xf32> to vector<8x128xf32>
    %12 = arith.subf %6, %11 : vector<8x128xf32>
    %13 = arith.mulf %12, %12 : vector<8x128xf32>
    %cst_7 = arith.constant dense<0.000000e+00> : vector<8xf32>
    %14 = vector.multi_reduction <add>, %13, %cst_7 [1] : vector<8x128xf32> to vector<8xf32>
    %15 = vector.shape_cast %14 : vector<8xf32> to vector<8x1xf32>
    %16 = arith.mulf %10, %10 : vector<8x1xf32>
    %cst_8 = arith.constant 1.190000e+02 : f32
    %17 = vector.broadcast %cst_8 : f32 to vector<8x1xf32>
    %18 = arith.mulf %17, %16 : vector<8x1xf32>
    %19 = arith.subf %15, %18 : vector<8x1xf32>
    %cst_9 = arith.constant 9.000000e+00 : f32
    %20 = vector.broadcast %cst_9 : f32 to vector<8x1xf32>
    %21 = arith.divf %19, %20 : vector<8x1xf32>
    %cst_10 = arith.constant 9.99999974E-6 : f32
    %22 = vector.broadcast %cst_10 : f32 to vector<8x1xf32>
    %23 = arith.addf %21, %22 : vector<8x1xf32>
    %24 = math.rsqrt %23 : vector<8x1xf32>
    %25 = vector.broadcast %24 : vector<8x1xf32> to vector<8x128xf32>
    %26 = arith.mulf %12, %25 : vector<8x128xf32>
    %c0_11 = arith.constant 0 : index
    %c0_12 = arith.constant 0 : index
    %27 = vector.load %arg4[%c0_11, %c0_12] : memref<1x128xf32, #tpu.memory_space<vmem>>, vector<1x128xf32>
    %28 = vector.broadcast %27 : vector<1x128xf32> to vector<8x128xf32>
    %29 = arith.mulf %26, %28 : vector<8x128xf32>
    %c0_13 = arith.constant 0 : index
    %c0_14 = arith.constant 0 : index
    %30 = vector.load %arg5[%c0_13, %c0_14] : memref<1x128xf32, #tpu.memory_space<vmem>>, vector<1x128xf32>
    %31 = vector.broadcast %30 : vector<1x128xf32> to vector<8x128xf32>
    %32 = arith.addf %29, %31 : vector<8x128xf32>
    %cst_15 = arith.constant 0.000000e+00 : f32
    %33 = vector.broadcast %cst_15 : f32 to vector<8x128xf32>
    %34 = arith.maximumf %32, %33 : vector<8x128xf32>
    %cst_16 = arith.constant 0.000000e+00 : f32
    %35 = vector.broadcast %cst_16 : f32 to vector<8x128xf32>
    %c0_17 = arith.constant 0 : index
    %c0_18 = arith.constant 0 : index
    %c0_19 = arith.constant 0 : index
    %36 = vector.load %arg7[%c0_17, %c0_18, %c0_19] : memref<5x1x128xf32, #tpu.memory_space<vmem>>, vector<1x1x128xf32>
    %37 = vector.shape_cast %36 : vector<1x1x128xf32> to vector<1x128xf32>
    %38 = vector.broadcast %37 : vector<1x128xf32> to vector<8x128xf32>
    %39 = arith.mulf %34, %38 : vector<8x128xf32>
    %cst_20 = arith.constant 1.000000e+01 : f32
    %40 = vector.broadcast %cst_20 : f32 to vector<8x128xf32>
    %41 = arith.minimumf %39, %40 : vector<8x128xf32>
    %c0_21 = arith.constant 0 : index
    %c0_22 = arith.constant 0 : index
    %c0_23 = arith.constant 0 : index
    %42 = vector.load %arg6[%c0_21, %c0_22, %c0_23] : memref<5x1x128xf32, #tpu.memory_space<vmem>>, vector<1x1x128xf32>
    %43 = vector.shape_cast %42 : vector<1x1x128xf32> to vector<1x128xf32>
    %44 = math.sin %41 : vector<8x128xf32>
    %45 = vector.broadcast %43 : vector<1x128xf32> to vector<8x128xf32>
    %46 = arith.mulf %45, %44 : vector<8x128xf32>
    %47 = arith.addf %35, %46 : vector<8x128xf32>
    %c1 = arith.constant 1 : index
    %c0_24 = arith.constant 0 : index
    %c0_25 = arith.constant 0 : index
    %48 = vector.load %arg7[%c1, %c0_24, %c0_25] : memref<5x1x128xf32, #tpu.memory_space<vmem>>, vector<1x1x128xf32>
    %49 = vector.shape_cast %48 : vector<1x1x128xf32> to vector<1x128xf32>
    %50 = vector.broadcast %49 : vector<1x128xf32> to vector<8x128xf32>
    %51 = arith.mulf %34, %50 : vector<8x128xf32>
    %cst_26 = arith.constant 1.000000e+01 : f32
    %52 = vector.broadcast %cst_26 : f32 to vector<8x128xf32>
    %53 = arith.minimumf %51, %52 : vector<8x128xf32>
    %c1_27 = arith.constant 1 : index
    %c0_28 = arith.constant 0 : index
    %c0_29 = arith.constant 0 : index
    %54 = vector.load %arg6[%c1_27, %c0_28, %c0_29] : memref<5x1x128xf32, #tpu.memory_space<vmem>>, vector<1x1x128xf32>
    %55 = vector.shape_cast %54 : vector<1x1x128xf32> to vector<1x128xf32>
    %56 = math.cos %53 : vector<8x128xf32>
    %57 = vector.broadcast %55 : vector<1x128xf32> to vector<8x128xf32>
    %58 = arith.mulf %57, %56 : vector<8x128xf32>
    %59 = arith.addf %47, %58 : vector<8x128xf32>
    %c2 = arith.constant 2 : index
    %c0_30 = arith.constant 0 : index
    %c0_31 = arith.constant 0 : index
    %60 = vector.load %arg7[%c2, %c0_30, %c0_31] : memref<5x1x128xf32, #tpu.memory_space<vmem>>, vector<1x1x128xf32>
    %61 = vector.shape_cast %60 : vector<1x1x128xf32> to vector<1x128xf32>
    %62 = vector.broadcast %61 : vector<1x128xf32> to vector<8x128xf32>
    %63 = arith.mulf %34, %62 : vector<8x128xf32>
    %cst_32 = arith.constant 1.000000e+01 : f32
    %64 = vector.broadcast %cst_32 : f32 to vector<8x128xf32>
    %65 = arith.minimumf %63, %64 : vector<8x128xf32>
    %c2_33 = arith.constant 2 : index
    %c0_34 = arith.constant 0 : index
    %c0_35 = arith.constant 0 : index
    %66 = vector.load %arg6[%c2_33, %c0_34, %c0_35] : memref<5x1x128xf32, #tpu.memory_space<vmem>>, vector<1x1x128xf32>
    %67 = vector.shape_cast %66 : vector<1x1x128xf32> to vector<1x128xf32>
    %68 = math.tanh %65 : vector<8x128xf32>
    %69 = vector.broadcast %67 : vector<1x128xf32> to vector<8x128xf32>
    %70 = arith.mulf %69, %68 : vector<8x128xf32>
    %71 = arith.addf %59, %70 : vector<8x128xf32>
    %c3 = arith.constant 3 : index
    %c0_36 = arith.constant 0 : index
    %c0_37 = arith.constant 0 : index
    %72 = vector.load %arg7[%c3, %c0_36, %c0_37] : memref<5x1x128xf32, #tpu.memory_space<vmem>>, vector<1x1x128xf32>
    %73 = vector.shape_cast %72 : vector<1x1x128xf32> to vector<1x128xf32>
    %74 = vector.broadcast %73 : vector<1x128xf32> to vector<8x128xf32>
    %75 = arith.mulf %34, %74 : vector<8x128xf32>
    %cst_38 = arith.constant 1.000000e+01 : f32
    %76 = vector.broadcast %cst_38 : f32 to vector<8x128xf32>
    %77 = arith.minimumf %75, %76 : vector<8x128xf32>
    %c3_39 = arith.constant 3 : index
    %c0_40 = arith.constant 0 : index
    %c0_41 = arith.constant 0 : index
    %78 = vector.load %arg6[%c3_39, %c0_40, %c0_41] : memref<5x1x128xf32, #tpu.memory_space<vmem>>, vector<1x1x128xf32>
    %79 = vector.shape_cast %78 : vector<1x1x128xf32> to vector<1x128xf32>
    %80 = arith.negf %77 : vector<8x128xf32>
    %81 = math.exp %80 : vector<8x128xf32>
    %cst_42 = arith.constant 1.000000e+00 : f32
    %82 = vector.broadcast %cst_42 : f32 to vector<8x128xf32>
    %83 = arith.addf %82, %81 : vector<8x128xf32>
    %84 = arith.divf %82, %83 : vector<8x128xf32>
    %85 = arith.mulf %77, %84 : vector<8x128xf32>
    %86 = vector.broadcast %79 : vector<1x128xf32> to vector<8x128xf32>
    %87 = arith.mulf %86, %85 : vector<8x128xf32>
    %88 = arith.addf %71, %87 : vector<8x128xf32>
    %c4 = arith.constant 4 : index
    %c0_43 = arith.constant 0 : index
    %c0_44 = arith.constant 0 : index
    %89 = vector.load %arg7[%c4, %c0_43, %c0_44] : memref<5x1x128xf32, #tpu.memory_space<vmem>>, vector<1x1x128xf32>
    %90 = vector.shape_cast %89 : vector<1x1x128xf32> to vector<1x128xf32>
    %91 = vector.broadcast %90 : vector<1x128xf32> to vector<8x128xf32>
    %92 = arith.mulf %34, %91 : vector<8x128xf32>
    %cst_45 = arith.constant 1.000000e+01 : f32
    %93 = vector.broadcast %cst_45 : f32 to vector<8x128xf32>
    %94 = arith.minimumf %92, %93 : vector<8x128xf32>
    %c4_46 = arith.constant 4 : index
    %c0_47 = arith.constant 0 : index
    %c0_48 = arith.constant 0 : index
    %95 = vector.load %arg6[%c4_46, %c0_47, %c0_48] : memref<5x1x128xf32, #tpu.memory_space<vmem>>, vector<1x1x128xf32>
    %96 = vector.shape_cast %95 : vector<1x1x128xf32> to vector<1x128xf32>
    %cst_49 = arith.constant 0.000000e+00 : f32
    %cst_50 = arith.constant 6.000000e+00 : f32
    %97 = vector.broadcast %cst_49 : f32 to vector<8x128xf32>
    %98 = arith.maximumf %97, %94 : vector<8x128xf32>
    %99 = vector.broadcast %cst_50 : f32 to vector<8x128xf32>
    %100 = arith.minimumf %99, %98 : vector<8x128xf32>
    %101 = vector.broadcast %96 : vector<1x128xf32> to vector<8x128xf32>
    %102 = arith.mulf %101, %100 : vector<8x128xf32>
    %103 = arith.addf %88, %102 : vector<8x128xf32>
    %104 = arith.truncf %103 : vector<8x128xf32> to vector<8x128xbf16>
    %c0_51 = arith.constant 0 : index
    %c0_52 = arith.constant 0 : index
    %105 = vector.load %arg8[%c0_51, %c0_52] : memref<128x128xbf16, #tpu.memory_space<vmem>>, vector<128x128xbf16>
    %cst_53 = arith.constant dense<0.000000e+00> : vector<8x128xf32>
    %106 = tpu.matmul %104, %105, %cst_53 {dimension_numbers = #tpu.dot_dimension_numbers<[1], [0], [0], [1], [0, 0, 1, 1], [], []>} : vector<8x128xbf16>, vector<128x128xbf16>, vector<8x128xf32> -> vector<8x128xf32>
    %c0_54 = arith.constant 0 : index
    %c0_55 = arith.constant 0 : index
    %107 = vector.load %arg9[%c0_54, %c0_55] : memref<1x128xf32, #tpu.memory_space<vmem>>, vector<1x128xf32>
    %108 = vector.broadcast %107 : vector<1x128xf32> to vector<8x128xf32>
    %109 = arith.addf %106, %108 : vector<8x128xf32>
    %cst_56 = arith.constant -1.000000e+02 : f32
    %cst_57 = arith.constant 1.000000e+02 : f32
    %110 = vector.broadcast %cst_56 : f32 to vector<8x128xf32>
    %111 = arith.maximumf %110, %109 : vector<8x128xf32>
    %112 = vector.broadcast %cst_57 : f32 to vector<8x128xf32>
    %113 = arith.minimumf %112, %111 : vector<8x128xf32>
    %c0_58 = arith.constant 0 : index
    %c0_59 = arith.constant 0 : index
    %114 = vector.load %arg10[%c0_58, %c0_59] : memref<8x128xf32, #tpu.memory_space<vmem>>, vector<8x128xf32>
    tpu.vector_store %arg10[%c0_58, %c0_59], %113 {strides = array<i32>} : memref<8x128xf32, #tpu.memory_space<vmem>>, vector<8x128xf32>,
    return
  }
  func.func @transform_0(%arg0: i32) -> (i32, i32) {
    %c0_i32 = arith.constant 0 : i32
    %c0_i32_0 = arith.constant 0 : i32
    return %arg0, %c0_i32 : i32, i32
  }
  func.func @transform_1(%arg0: i32) -> (i32, i32) {
    %c0_i32 = arith.constant 0 : i32
    %c0_i32_0 = arith.constant 0 : i32
    %c0_i32_1 = arith.constant 0 : i32
    return %c0_i32, %c0_i32_0 : i32, i32
  }
  func.func @transform_2(%arg0: i32) -> (i32, i32) {
    %c0_i32 = arith.constant 0 : i32
    %c0_i32_0 = arith.constant 0 : i32
    %c0_i32_1 = arith.constant 0 : i32
    return %c0_i32, %c0_i32_0 : i32, i32
  }
  func.func @transform_3(%arg0: i32) -> (i32, i32) {
    %c0_i32 = arith.constant 0 : i32
    %c0_i32_0 = arith.constant 0 : i32
    %c0_i32_1 = arith.constant 0 : i32
    return %c0_i32, %c0_i32_0 : i32, i32
  }
  func.func @transform_4(%arg0: i32) -> (i32, i32) {
    %c0_i32 = arith.constant 0 : i32
    %c0_i32_0 = arith.constant 0 : i32
    %c0_i32_1 = arith.constant 0 : i32
    return %c0_i32, %c0_i32_0 : i32, i32
  }
  func.func @transform_5(%arg0: i32) -> (i32, i32, i32) {
    %c0_i32 = arith.constant 0 : i32
    %c0_i32_0 = arith.constant 0 : i32
    %c0_i32_1 = arith.constant 0 : i32
    %c0_i32_2 = arith.constant 0 : i32
    return %c0_i32, %c0_i32_0, %c0_i32_1 : i32, i32, i32
  }
  func.func @transform_6(%arg0: i32) -> (i32, i32, i32) {
    %c0_i32 = arith.constant 0 : i32
    %c0_i32_0 = arith.constant 0 : i32
    %c0_i32_1 = arith.constant 0 : i32
    %c0_i32_2 = arith.constant 0 : i32
    return %c0_i32, %c0_i32_0, %c0_i32_1 : i32, i32, i32
  }
  func.func @transform_7(%arg0: i32) -> (i32, i32) {
    %c0_i32 = arith.constant 0 : i32
    %c0_i32_0 = arith.constant 0 : i32
    %c0_i32_1 = arith.constant 0 : i32
    return %c0_i32, %c0_i32_0 : i32, i32
  }
  func.func @transform_8(%arg0: i32) -> (i32, i32) {
    %c0_i32 = arith.constant 0 : i32
    %c0_i32_0 = arith.constant 0 : i32
    %c0_i32_1 = arith.constant 0 : i32
    return %c0_i32, %c0_i32_0 : i32, i32
  }
  func.func @transform_9(%arg0: i32) -> (i32, i32) {
    %c0_i32 = arith.constant 0 : i32
    %c0_i32_0 = arith.constant 0 : i32
    return %arg0, %c0_i32 : i32, i32
  }
}

</mosaic_0001>

<llo_original>
// kernel: tpu_custom_call.1
$region0: #{tpu_custom_call.1}
  #allocation0 [shape = 'u32[]', space=smem, size = 0x4, offset = 0x4, fixed_abs, tag = 'smem constant byte address 0x4 - core index']
  #allocation1 [shape = 'u32[144,128]{1,0:T(1,128)}', space=vmem, size = 0x12000, scoped, tag = 'internal scratch']
  %s0 = inlined_call_operand.hbm [shape: f32[8,128], index: 0, kind: input, shape index: {}]
  %s1 = inlined_call_operand.hbm [shape: bf16[128,128], index: 1, kind: input, shape index: {}]
  %s2 = inlined_call_operand.vmem [shape: f32[1,128], index: 2, kind: input, shape index: {}]
  %s3 = inlined_call_operand.hbm [shape: f32[1,128], index: 3, kind: input, shape index: {}]
  %s4 = inlined_call_operand.vmem [shape: f32[1,128], index: 4, kind: input, shape index: {}]
  %s5 = inlined_call_operand.vmem [shape: f32[5,1,128], index: 5, kind: input, shape index: {}]
  %s6 = inlined_call_operand.vmem [shape: f32[5,1,128], index: 6, kind: input, shape index: {}]
  %s7 = inlined_call_operand.hbm [shape: bf16[128,128], index: 7, kind: input, shape index: {}]
  %s8 = inlined_call_operand.vmem [shape: f32[1,128], index: 8, kind: input, shape index: {}]
  %s9 = inlined_call_operand.hbm [shape: f32[8,128], index: 9, kind: output, shape index: {}]
  %s10 = sld [smem:[#allocation0]]
  $region62: #{tpu_custom_call.1} parent=0
    _
  %s12 = ssub.s32 1, %s10
  %s13 = scalar_select 0, %s12, %s10
  $region1: #{tpu_custom_call.1} parent=0
    #allocation2 [shape = 'u8[4096]{0}', space=vmem, size = 0x1000, scoped, tag = 'input window, operand 0, single buffered']
    #allocation3 [shape = 's32[1]{0}', space=sflag, size = 0x4, scoped, tag = 'scoped memory for tpu_custom_call.1']
    #allocation4 [shape = 's32[1]{0}', space=sflag, size = 0x4, scoped, tag = 'scoped memory for tpu_custom_call.1']
    #allocation5 [shape = 'u8[32768]{0}', space=vmem, size = 0x8000, scoped, tag = 'input window, operand 1, single buffered']
    #allocation6 [shape = 's32[1]{0}', space=sflag, size = 0x4, scoped, tag = 'scoped memory for tpu_custom_call.1']
    #allocation7 [shape = 'u8[512]{0}', space=vmem, size = 0x400, scoped, tag = 'input window, operand 3, single buffered']
    #allocation8 [shape = 'u8[32768]{0}', space=vmem, size = 0x8000, scoped, tag = 'input window, operand 7, single buffered']
    #allocation9 [shape = 's32[1]{0}', space=sflag, size = 0x4, scoped, tag = 'scoped memory for tpu_custom_call.1']
    #allocation10 [shape = 'u8[4096]{0}', space=vmem, size = 0x1000, scoped, tag = 'output window, operand 0, single buffered']
    %14 = vsyncpa [#allocation3], 0
    %15 = vsyncpa [#allocation6], 0
    %16 = vsyncpa [#allocation9], 0
    %17 = vsyncpa [#allocation4], 0
    // Predicated region
    $region2: #{tpu_custom_call.1} parent=1 // pred_check
      _
    $region3: #{tpu_custom_call.1} parent=1 // pred_check_branch
      %19 = sbr.rel (0) target = $region5
    $region4: #{tpu_custom_call.1} parent=1 // pred_region
      %s21 = ssub.s32 128, 128
      %22 = vsyncadd [#allocation3], %s21
      %s24 = sshll.u32 [#allocation2], 4
      %s25 = int_to_ptr.vmem [resolvable:$true] %s24
      %27 = dma.hbm_to_vmem [thread:$0]  %s0, 128, %s25, [#allocation3]
    $region5: #{tpu_custom_call.1} parent=1 // pred_fallthru
      _
    // Predicated region
    $region6: #{tpu_custom_call.1} parent=1 // pred_check
      _
    $region7: #{tpu_custom_call.1} parent=1 // pred_check_branch
      %29 = sbr.rel (0) target = $region9
    $region8: #{tpu_custom_call.1} parent=1 // pred_region
      %s31 = ssub.s32 1024, 1024
      %32 = vsyncadd [#allocation6], %s31
      %s33 = sshll.u32 [#allocation5], 4
      %s34 = int_to_ptr.vmem [resolvable:$true] %s33
      %39 = dma.hbm_to_vmem [thread:$0]  %s1, 1024, %s34, [#allocation6], 64, 64, 4
    $region9: #{tpu_custom_call.1} parent=1 // pred_fallthru
      _
    // Predicated region
    $region10: #{tpu_custom_call.1} parent=1 // pred_check
      _
    $region11: #{tpu_custom_call.1} parent=1 // pred_check_branch
      %41 = sbr.rel (0) target = $region13
    $region12: #{tpu_custom_call.1} parent=1 // pred_region
      _
    $region13: #{tpu_custom_call.1} parent=1 // pred_fallthru
      _
    // Predicated region
    $region14: #{tpu_custom_call.1} parent=1 // pred_check
      _
    $region15: #{tpu_custom_call.1} parent=1 // pred_check_branch
      %43 = sbr.rel (0) target = $region17
    $region16: #{tpu_custom_call.1} parent=1 // pred_region
      %s45 = ssub.s32 16, 16
      %46 = vsyncadd [#allocation6], %s45
      %s48 = sshll.u32 [#allocation7], 4
      %s49 = int_to_ptr.vmem [resolvable:$true] %s48
      %51 = dma.hbm_to_vmem [thread:$0]  %s3, 16, %s49, [#allocation6]
    $region17: #{tpu_custom_call.1} parent=1 // pred_fallthru
      _
    // Predicated region
    $region18: #{tpu_custom_call.1} parent=1 // pred_check
      _
    $region19: #{tpu_custom_call.1} parent=1 // pred_check_branch
      %53 = sbr.rel (0) target = $region21
    $region20: #{tpu_custom_call.1} parent=1 // pred_region
      _
    $region21: #{tpu_custom_call.1} parent=1 // pred_fallthru
      _
    // Predicated region
    $region22: #{tpu_custom_call.1} parent=1 // pred_check
      _
    $region23: #{tpu_custom_call.1} parent=1 // pred_check_branch
      %55 = sbr.rel (0) target = $region25
    $region24: #{tpu_custom_call.1} parent=1 // pred_region
      _
    $region25: #{tpu_custom_call.1} parent=1 // pred_fallthru
      _
    // Predicated region
    $region26: #{tpu_custom_call.1} parent=1 // pred_check
      _
    $region27: #{tpu_custom_call.1} parent=1 // pred_check_branch
      %57 = sbr.rel (0) target = $region29
    $region28: #{tpu_custom_call.1} parent=1 // pred_region
      _
    $region29: #{tpu_custom_call.1} parent=1 // pred_fallthru
      _
    // Predicated region
    $region30: #{tpu_custom_call.1} parent=1 // pred_check
      _
    $region31: #{tpu_custom_call.1} parent=1 // pred_check_branch
      %59 = sbr.rel (0) target = $region33
    $region32: #{tpu_custom_call.1} parent=1 // pred_region
      %s61 = ssub.s32 1024, 1024
      %62 = vsyncadd [#allocation9], %s61
      %s63 = sshll.u32 [#allocation8], 4
      %s64 = int_to_ptr.vmem [resolvable:$true] %s63
      %69 = dma.hbm_to_vmem [thread:$0]  %s7, 1024, %s64, [#allocation9], 64, 64, 4
    $region33: #{tpu_custom_call.1} parent=1 // pred_fallthru
      _
    // Predicated region
    $region34: #{tpu_custom_call.1} parent=1 // pred_check
      _
    $region35: #{tpu_custom_call.1} parent=1 // pred_check_branch
      %71 = sbr.rel (0) target = $region37
    $region36: #{tpu_custom_call.1} parent=1 // pred_region
      _
    $region37: #{tpu_custom_call.1} parent=1 // pred_fallthru
      _
    // Predicated region
    $region38: #{tpu_custom_call.1} parent=1 // pred_check
      _
    $region39: #{tpu_custom_call.1} parent=1 // pred_check_branch
      %73 = sbr.rel (0) target = $region41
    $region40: #{tpu_custom_call.1} parent=1 // pred_region
      %74 = dma.done [#allocation3], 128
    $region41: #{tpu_custom_call.1} parent=1 // pred_fallthru
      _
    // Predicated region
    $region42: #{tpu_custom_call.1} parent=1 // pred_check
      _
    $region43: #{tpu_custom_call.1} parent=1 // pred_check_branch
      %76 = sbr.rel (0) target = $region45
    $region44: #{tpu_custom_call.1} parent=1 // pred_region
      %77 = dma.done [#allocation6], 1024
    $region45: #{tpu_custom_call.1} parent=1 // pred_fallthru
      _
    // Predicated region
    $region46: #{tpu_custom_call.1} parent=1 // pred_check
      _
    $region47: #{tpu_custom_call.1} parent=1 // pred_check_branch
      %79 = sbr.rel (0) target = $region49
    $region48: #{tpu_custom_call.1} parent=1 // pred_region
      %80 = dma.done [#allocation6], 16
    $region49: #{tpu_custom_call.1} parent=1 // pred_fallthru
      _
    // Predicated region
    $region50: #{tpu_custom_call.1} parent=1 // pred_check
      _
    $region51: #{tpu_custom_call.1} parent=1 // pred_check_branch
      %82 = sbr.rel (0) target = $region53
    $region52: #{tpu_custom_call.1} parent=1 // pred_region
      %83 = dma.done [#allocation9], 1024
    $region53: #{tpu_custom_call.1} parent=1 // pred_fallthru
      _
    %v85 = vld [vmem:[#allocation2] sm:$0xff]
    %v86 = vpack.c.bf16 %v85, %v85
    %v87 = vld [vmem:[#allocation5] sm:$0xf]
    %v88 = vld [vmem:[#allocation5 + $0x4] sm:$0xf]
    %v89 = vld [vmem:[#allocation5 + $0x8] sm:$0xf]
    %v90 = vld [vmem:[#allocation5 + $0xc] sm:$0xf]
    %v91 = vld [vmem:[#allocation5 + $0x10] sm:$0xf]
    %v92 = vld [vmem:[#allocation5 + $0x14] sm:$0xf]
    %v93 = vld [vmem:[#allocation5 + $0x18] sm:$0xf]
    %v94 = vld [vmem:[#allocation5 + $0x1c] sm:$0xf]
    %v95 = vld [vmem:[#allocation5 + $0x20] sm:$0xf]
    %v96 = vld [vmem:[#allocation5 + $0x24] sm:$0xf]
    %v97 = vld [vmem:[#allocation5 + $0x28] sm:$0xf]
    %v98 = vld [vmem:[#allocation5 + $0x2c] sm:$0xf]
    %v99 = vld [vmem:[#allocation5 + $0x30] sm:$0xf]
    %v100 = vld [vmem:[#allocation5 + $0x34] sm:$0xf]
    %v101 = vld [vmem:[#allocation5 + $0x38] sm:$0xf]
    %v102 = vld [vmem:[#allocation5 + $0x3c] sm:$0xf]
    %v103 = vld [vmem:[%s2] sm:$0x1]
    %v105 = vlaneseq
    %v106 = vshrl.u32 %v105, 7
    %v107 = vsub.s32 0, %v106
    %v108 = vrot.slane %v103, %v107
    %v126 = vunpack.c.l.b16 %v87
    %v127 = vunpack.c.l.b16 %v88
    %v128 = vunpack.c.l.b16 %v89
    %v129 = vunpack.c.l.b16 %v90
    %v130 = vunpack.c.l.b16 %v91
    %v131 = vunpack.c.l.b16 %v92
    %v132 = vunpack.c.l.b16 %v93
    %v133 = vunpack.c.l.b16 %v94
    %v134 = vunpack.c.l.b16 %v95
    %v135 = vunpack.c.l.b16 %v96
    %v136 = vunpack.c.l.b16 %v97
    %v137 = vunpack.c.l.b16 %v98
    %v138 = vunpack.c.l.b16 %v99
    %v139 = vunpack.c.l.b16 %v100
    %v140 = vunpack.c.l.b16 %v101
    %v141 = vunpack.c.l.b16 %v102
    %v142 = vpack.c.b16 %v127, %v126
    %v143 = vpack.c.b16 %v129, %v128
    %v144 = vpack.c.b16 %v131, %v130
    %v145 = vpack.c.b16 %v133, %v132
    %v146 = vpack.c.b16 %v135, %v134
    %v147 = vpack.c.b16 %v137, %v136
    %v148 = vpack.c.b16 %v139, %v138
    %v149 = vpack.c.b16 %v141, %v140
    %158 = vmatprep.subr.bf16.mxu0 0
    %159 = vmatpush1.bf16.msra.mxu0 %v142
    %160 = vmatprep.subr.bf16.mxu0 0
    %161 = vmatpush1.bf16.msra.mxu0 %v143
    %162 = vmatprep.subr.bf16.mxu0 0
    %163 = vmatpush1.bf16.msra.mxu0 %v144
    %164 = vmatprep.subr.bf16.mxu0 0
    %165 = vmatpush1.bf16.msra.mxu0 %v145
    %166 = vmatprep.subr.bf16.mxu0 0
    %167 = vmatpush1.bf16.msra.mxu0 %v146
    %168 = vmatprep.subr.bf16.mxu0 0
    %169 = vmatpush1.bf16.msra.mxu0 %v147
    %170 = vmatprep.subr.bf16.mxu0 0
    %171 = vmatpush1.bf16.msra.mxu0 %v148
    %172 = vmatprep.subr.bf16.mxu0 0
    %173 = vmatpush1.bf16.msra.mxu0 %v149
    %174 = vmatprep.subr.bf16.mxu0 0
    %175 = vmatpush1.bf16.msra.mxu0 0
    %176 = vmatprep.subr.bf16.mxu0 0
    %177 = vmatpush1.bf16.msra.mxu0 0
    %178 = vmatprep.subr.bf16.mxu0 0
    %179 = vmatpush1.bf16.msra.mxu0 0
    %180 = vmatprep.subr.bf16.mxu0 0
    %181 = vmatpush1.bf16.msra.mxu0 0
    %182 = vmatprep.subr.bf16.mxu0 0
    %183 = vmatpush1.bf16.msra.mxu0 0
    %184 = vmatprep.subr.bf16.mxu0 0
    %185 = vmatpush1.bf16.msra.mxu0 0
    %186 = vmatprep.subr.bf16.mxu0 0
    %187 = vmatpush1.bf16.msra.mxu0 0
    %188 = vmatprep.subr.bf16.mxu0 0
    %189 = vmatpush1.bf16.msra.mxu0 0
    %190 = vmatprep.mubr.bf16.mxu0 0
    %191 = vmatmul.mubr.bf16.gmra.mrb[0].mxu0 %v86
    %v192 = vpop.f32.mrb[0].mxu0
    %v193 = vadd.f32 %v108, %v192
    %v194 = vpop.f32.mrb[0].mxu0
    %v195 = vpop.f32.mrb[0].mxu0
    %v196 = vpop.f32.mrb[0].mxu0
    %197 = vdwg.mxu0
    %198 = vadd.xlane.f32.xlu0 %v193
    %v199 = vpop.xlane.xlu0 %198
    %v200 = vrcp.pop 9.0
    %v201 = vmul.f32 %v199, %v200
    %v202 = vsub.f32 %v193, %v201
    %v203 = vmul.f32 %v202, %v202
    %204 = vadd.xlane.f32.xlu0 %v203
    %v205 = vpop.xlane.xlu0 %204
    %v206 = vmul.f32 %v201, %v201
    %v207 = vmul.f32 %v206, 119.0
    %v208 = vsub.f32 %v205, %v207
    %v209 = vmul.f32 %v208, %v200
    %v210 = vadd.f32 %v209, 1e-05
    %v211 = vrsqrt.pop %v210
    %v212 = vmul.f32 %v202, %v211
    %v213 = vld [vmem:[#allocation7] sm:$0x1]
    %v215 = vlaneseq
    %v216 = vshrl.u32 %v215, 7
    %v217 = vsub.s32 0, %v216
    %v218 = vrot.slane %v213, %v217
    %v220 = vmul.f32 %v212, %v218
    %v221 = vld [vmem:[%s4] sm:$0x1]
    %v223 = vlaneseq
    %v224 = vshrl.u32 %v223, 7
    %v225 = vsub.s32 0, %v224
    %v226 = vrot.slane %v221, %v225
    %v228 = vadd.f32 %v220, %v226
    %v229 = vmax.f32 %v228, 0.0
    %v230 = vld [vmem:[%s6] sm:$0x1]
    %v232 = vlaneseq
    %v233 = vshrl.u32 %v232, 7
    %v234 = vsub.s32 0, %v233
    %v235 = vrot.slane %v230, %v234
    %v237 = vmul.f32 %v229, %v235
    %v238 = vmin.f32 %v237, 10.0
    %v239 = vld [vmem:[%s5] sm:$0x1]
    %v240 = vand.u32 2147483647, %v238
    %vm241 = vcmp.le.f32.partialorder %v240, 0.7853982
    %vm242 = vcmp.lt.s32.totalorder %v238, 0
    %v243 = vand.u32 %v238, 2139095040
    %v244 = vshrl.u32 %v243, 23
    %v245 = vsub.s32 %v244, 127
    %v246 = vand.u32 2147483647, %v238
    %v247 = vand.u32 %v246, 8388607
    %v248 = vor.u32 %v247, 8388608
    %v249 = vsub.s32 0, %v248
    %v250 = vadd.s32 %v245, 1
    %vm251 = vcmp.gt.s32.totalorder %v250, 0
    %v252 = vsel %vm251, %v250, 0
    %v253 = vshrl.u32 %v252, 5
    %v254 = vand.u32 %v252, 31
    %v255 = vsub.s32 32, %v254
    %v256 = vshrl.u32 683565275, %v255
    %v257 = vshll.u32 683565275, %v254
    %v258 = vshrl.u32 2475754826, %v255
    %v259 = vor.u32 %v257, %v258
    %v260 = vshll.u32 2475754826, %v254
    %v261 = vshrl.u32 2131351028, %v255
    %v262 = vor.u32 %v260, %v261
    %v263 = vshll.u32 2131351028, %v254
    %v264 = vshrl.u32 2102212464, %v255
    %v265 = vor.u32 %v263, %v264
    %v266 = vshll.u32 2102212464, %v254
    %v267 = vshrl.u32 920167782, %v255
    %v268 = vor.u32 %v266, %v267
    %v269 = vshll.u32 920167782, %v254
    %v270 = vshrl.u32 1326507024, %v255
    %v271 = vor.u32 %v269, %v270
    %vm272 = vcmp.lt.s32.totalorder %v253, 1
    %vm273 = vcmp.lt.s32.totalorder %v253, 2
    %vm274 = vcmp.lt.s32.totalorder %v253, 3
    %vm275 = vcmp.lt.s32.totalorder %v253, 4
    %v276 = vsel %vm272, %v256, %v259
    %v277 = vsel %vm275, %v265, 2102212464
    %v278 = vsel %vm274, %v262, %v277
    %v279 = vsel %vm273, %v276, %v278
    %v280 = vsel %vm272, %v259, %v262
    %v281 = vsel %vm275, %v268, 920167782
    %v282 = vsel %vm274, %v265, %v281
    %v283 = vsel %vm273, %v280, %v282
    %v284 = vsel %vm272, %v262, %v265
    %v285 = vsel %vm275, %v271, 1326507024
    %v286 = vsel %vm274, %v268, %v285
    %v287 = vsel %vm273, %v284, %v286
    %v288 = vshll.u32 %v248, 8
    %v289 = vmul.u32.u64.compose %v288, %v287
    %v290 = vextract.low.u32 %v289
    %v291 = vextract.high.u32 %v289
    %v292 = vmul.u32.u64.compose %v288, %v283
    %v293 = vextract.low.u32 %v292
    %v294 = vextract.high.u32 %v292
    %v295 = vmul.u32 %v288, %v279
    %v296 = vadd.s32 %v291, %v293
    %vm297 = vc.u32 %v291, %v293
    %v298 = vadd.s32 %v294, 1
    %v299 = vsel %vm297, %v298, %v294
    %v300 = vadd.s32 %v295, %v299
    %v301 = vadd.s32 %v300, 536870912
    %v302 = vshrl.u32 %v301, 30
    %v303 = vshll.u32 %v302, 30
    %v304 = vsub.s32 %v300, %v303
    %vm305 = vcmp.lt.s32.totalorder %v304, 0
    %v306 = vsub.s32 0, %v304
    %v307 = vsel %vm305, %v306, %v304
    %v308 = vclz %v307
    %v309 = vsub.s32 %v308, 2
    %vm310 = vcmp.gt.s32.totalorder 0, %v309
    %v311 = vsel %vm310, 0, %v309
    %v312 = vsub.s32 32, %v311
    %v313 = vshll.u32 %v304, %v311
    %v314 = vshrl.u32 %v296, %v312
    %v315 = vor.u32 %v313, %v314
    %v316 = vsub.s32 4294967266, %v311
    %v317 = vadd.s32 %v316, 127
    %v318 = vshll.u32 %v317, 23
    %v319 = vor.u32 4788187, %v318
    %v320 = vand.u32 2147483647, %v319
    %v322 = vcvt.s32.f32 %v315
    %v323 = vmul.f32 %v322, %v320
    %v324 = vxor.u32 %v323, 2147483648
    %v325 = vsel %vm242, %v324, %v323
    %v326 = vsub.s32 4, %v302
    %v327 = vsel %vm242, %v326, %v302
    %v328 = vsel %vm241, %v238, %v325
    %v329 = vsel %vm241, 0, %v327
    %v330 = vcosq.f32.pop %v328
    %v331 = vsinq.f32.pop %v328
    %vm332 = vweird.f32 %v238
    %v333 = vadd.s32 %v329, 3
    %v334 = vand.u32 %v333, 3
    %vm335 = vcmp.lt.s32.totalorder %v334, 2
    %vm336 = vcmp.eq.s32.totalorder %v334, 0
    %v337 = vxor.u32 %v331, 2147483648
    %v338 = vsel %vm336, %v330, %v337
    %vm339 = vcmp.eq.s32.totalorder %v334, 2
    %v340 = vxor.u32 %v330, 2147483648
    %v341 = vsel %vm339, %v340, %v331
    %v342 = vsel %vm335, %v338, %v341
    %v343 = vsel %vm332, nan, %v342
    %v345 = vlaneseq
    %v346 = vshrl.u32 %v345, 7
    %v347 = vsub.s32 0, %v346
    %v348 = vrot.slane %v239, %v347
    %v350 = vmul.f32 %v348, %v343
    %v351 = vadd.f32 %v350, 0.0
    %s352 = scalar_lea.vmem %s6, 1
    %v353 = vld [vmem:[%s352] sm:$0x1]
    %v355 = vlaneseq
    %v356 = vshrl.u32 %v355, 7
    %v357 = vsub.s32 0, %v356
    %v358 = vrot.slane %v353, %v357
    %v360 = vmul.f32 %v229, %v358
    %v361 = vmin.f32 %v360, 10.0
    %s362 = scalar_lea.vmem %s5, 1
    %v363 = vld [vmem:[%s362] sm:$0x1]
    %v364 = vand.u32 2147483647, %v361
    %vm365 = vcmp.le.f32.partialorder %v364, 0.7853982
    %vm366 = vcmp.lt.s32.totalorder %v361, 0
    %v367 = vand.u32 %v361, 2139095040
    %v368 = vshrl.u32 %v367, 23
    %v369 = vsub.s32 %v368, 127
    %v370 = vand.u32 2147483647, %v361
    %v371 = vand.u32 %v370, 8388607
    %v372 = vor.u32 %v371, 8388608
    %v373 = vsub.s32 0, %v372
    %v374 = vadd.s32 %v369, 1
    %vm375 = vcmp.gt.s32.totalorder %v374, 0
    %v376 = vsel %vm375, %v374, 0
    %v377 = vshrl.u32 %v376, 5
    %v378 = vand.u32 %v376, 31
    %v379 = vsub.s32 32, %v378
    %v380 = vshrl.u32 683565275, %v379
    %v381 = vshll.u32 683565275, %v378
    %v382 = vshrl.u32 2475754826, %v379
    %v383 = vor.u32 %v381, %v382
    %v384 = vshll.u32 2475754826, %v378
    %v385 = vshrl.u32 2131351028, %v379
    %v386 = vor.u32 %v384, %v385
    %v387 = vshll.u32 2131351028, %v378
    %v388 = vshrl.u32 2102212464, %v379
    %v389 = vor.u32 %v387, %v388
    %v390 = vshll.u32 2102212464, %v378
    %v391 = vshrl.u32 920167782, %v379
    %v392 = vor.u32 %v390, %v391
    %v393 = vshll.u32 920167782, %v378
    %v394 = vshrl.u32 1326507024, %v379
    %v395 = vor.u32 %v393, %v394
    %vm396 = vcmp.lt.s32.totalorder %v377, 1
    %vm397 = vcmp.lt.s32.totalorder %v377, 2
    %vm398 = vcmp.lt.s32.totalorder %v377, 3
    %vm399 = vcmp.lt.s32.totalorder %v377, 4
    %v400 = vsel %vm396, %v380, %v383
    %v401 = vsel %vm399, %v389, 2102212464
    %v402 = vsel %vm398, %v386, %v401
    %v403 = vsel %vm397, %v400, %v402
    %v404 = vsel %vm396, %v383, %v386
    %v405 = vsel %vm399, %v392, 920167782
    %v406 = vsel %vm398, %v389, %v405
    %v407 = vsel %vm397, %v404, %v406
    %v408 = vsel %vm396, %v386, %v389
    %v409 = vsel %vm399, %v395, 1326507024
    %v410 = vsel %vm398, %v392, %v409
    %v411 = vsel %vm397, %v408, %v410
    %v412 = vshll.u32 %v372, 8
    %v413 = vmul.u32.u64.compose %v412, %v411
    %v414 = vextract.low.u32 %v413
    %v415 = vextract.high.u32 %v413
    %v416 = vmul.u32.u64.compose %v412, %v407
    %v417 = vextract.low.u32 %v416
    %v418 = vextract.high.u32 %v416
    %v419 = vmul.u32 %v412, %v403
    %v420 = vadd.s32 %v415, %v417
    %vm421 = vc.u32 %v415, %v417
    %v422 = vadd.s32 %v418, 1
    %v423 = vsel %vm421, %v422, %v418
    %v424 = vadd.s32 %v419, %v423
    %v425 = vadd.s32 %v424, 536870912
    %v426 = vshrl.u32 %v425, 30
    %v427 = vshll.u32 %v426, 30
    %v428 = vsub.s32 %v424, %v427
    %vm429 = vcmp.lt.s32.totalorder %v428, 0
    %v430 = vsub.s32 0, %v428
    %v431 = vsel %vm429, %v430, %v428
    %v432 = vclz %v431
    %v433 = vsub.s32 %v432, 2
    %vm434 = vcmp.gt.s32.totalorder 0, %v433
    %v435 = vsel %vm434, 0, %v433
    %v436 = vsub.s32 32, %v435
    %v437 = vshll.u32 %v428, %v435
    %v438 = vshrl.u32 %v420, %v436
    %v439 = vor.u32 %v437, %v438
    %v440 = vsub.s32 4294967266, %v435
    %v441 = vadd.s32 %v440, 127
    %v442 = vshll.u32 %v441, 23
    %v443 = vor.u32 4788187, %v442
    %v444 = vand.u32 2147483647, %v443
    %v446 = vcvt.s32.f32 %v439
    %v447 = vmul.f32 %v446, %v444
    %v448 = vxor.u32 %v447, 2147483648
    %v449 = vsel %vm366, %v448, %v447
    %v450 = vsub.s32 4, %v426
    %v451 = vsel %vm366, %v450, %v426
    %v452 = vsel %vm365, %v361, %v449
    %v453 = vsel %vm365, 0, %v451
    %v454 = vcosq.f32.pop %v452
    %v455 = vsinq.f32.pop %v452
    %vm456 = vweird.f32 %v361
    %v457 = vand.u32 %v453, 3
    %vm458 = vcmp.lt.s32.totalorder %v457, 2
    %vm459 = vcmp.eq.s32.totalorder %v457, 0
    %v460 = vxor.u32 %v455, 2147483648
    %v461 = vsel %vm459, %v454, %v460
    %vm462 = vcmp.eq.s32.totalorder %v457, 2
    %v463 = vxor.u32 %v454, 2147483648
    %v464 = vsel %vm462, %v463, %v455
    %v465 = vsel %vm458, %v461, %v464
    %v466 = vsel %vm456, nan, %v465
    %v468 = vlaneseq
    %v469 = vshrl.u32 %v468, 7
    %v470 = vsub.s32 0, %v469
    %v471 = vrot.slane %v363, %v470
    %v473 = vmul.f32 %v471, %v466
    %v474 = vadd.f32 %v351, %v473
    %s475 = scalar_lea.vmem %s6, 2
    %v476 = vld [vmem:[%s475] sm:$0x1]
    %v478 = vlaneseq
    %v479 = vshrl.u32 %v478, 7
    %v480 = vsub.s32 0, %v479
    %v481 = vrot.slane %v476, %v480
    %v483 = vmul.f32 %v229, %v481
    %v484 = vmin.f32 %v483, 10.0
    %s485 = scalar_lea.vmem %s5, 2
    %v486 = vld [vmem:[%s485] sm:$0x1]
    %v487 = vtanh.pop %v484
    %v489 = vlaneseq
    %v490 = vshrl.u32 %v489, 7
    %v491 = vsub.s32 0, %v490
    %v492 = vrot.slane %v486, %v491
    %v494 = vmul.f32 %v492, %v487
    %v495 = vadd.f32 %v474, %v494
    %s496 = scalar_lea.vmem %s6, 3
    %v497 = vld [vmem:[%s496] sm:$0x1]
    %v499 = vlaneseq
    %v500 = vshrl.u32 %v499, 7
    %v501 = vsub.s32 0, %v500
    %v502 = vrot.slane %v497, %v501
    %v504 = vmul.f32 %v229, %v502
    %v505 = vmin.f32 %v504, 10.0
    %s506 = scalar_lea.vmem %s5, 3
    %v507 = vld [vmem:[%s506] sm:$0x1]
    %v508 = vxor.u32 %v505, 2147483648
    %v509 = vmul.f32 %v508, 1.442695
    %v510 = vpow.pop %v509
    %v511 = vadd.f32 %v510, 1.0
    %v512 = vrcp.pop %v511
    %v513 = vmul.f32 1.0, %v512
    %v514 = vmul.f32 %v505, %v513
    %v516 = vlaneseq
    %v517 = vshrl.u32 %v516, 7
    %v518 = vsub.s32 0, %v517
    %v519 = vrot.slane %v507, %v518
    %v521 = vmul.f32 %v519, %v514
    %v522 = vadd.f32 %v495, %v521
    %s523 = scalar_lea.vmem %s6, 4
    %v524 = vld [vmem:[%s523] sm:$0x1]
    %v526 = vlaneseq
    %v527 = vshrl.u32 %v526, 7
    %v528 = vsub.s32 0, %v527
    %v529 = vrot.slane %v524, %v528
    %v531 = vmul.f32 %v229, %v529
    %v532 = vmin.f32 %v531, 10.0
    %s533 = scalar_lea.vmem %s5, 4
    %v534 = vld [vmem:[%s533] sm:$0x1]
    %v535 = vmax.f32 %v532, 0.0
    %v536 = vmin.f32 %v535, 6.0
    %v538 = vlaneseq
    %v539 = vshrl.u32 %v538, 7
    %v540 = vsub.s32 0, %v539
    %v541 = vrot.slane %v534, %v540
    %v543 = vmul.f32 %v541, %v536
    %v544 = vadd.f32 %v522, %v543
    %v545 = vpack.c.bf16 %v544, %v544
    %v546 = vld [vmem:[#allocation8] sm:$0xf]
    %v547 = vld [vmem:[#allocation8 + $0x4] sm:$0xf]
    %v548 = vld [vmem:[#allocation8 + $0x8] sm:$0xf]
    %v549 = vld [vmem:[#allocation8 + $0xc] sm:$0xf]
    %v550 = vld [vmem:[#allocation8 + $0x10] sm:$0xf]
    %v551 = vld [vmem:[#allocation8 + $0x14] sm:$0xf]
    %v552 = vld [vmem:[#allocation8 + $0x18] sm:$0xf]
    %v553 = vld [vmem:[#allocation8 + $0x1c] sm:$0xf]
    %v554 = vld [vmem:[#allocation8 + $0x20] sm:$0xf]
    %v555 = vld [vmem:[#allocation8 + $0x24] sm:$0xf]
    %v556 = vld [vmem:[#allocation8 + $0x28] sm:$0xf]
    %v557 = vld [vmem:[#allocation8 + $0x2c] sm:$0xf]
    %v558 = vld [vmem:[#allocation8 + $0x30] sm:$0xf]
    %v559 = vld [vmem:[#allocation8 + $0x34] sm:$0xf]
    %v560 = vld [vmem:[#allocation8 + $0x38] sm:$0xf]
    %v561 = vld [vmem:[#allocation8 + $0x3c] sm:$0xf]
    %v562 = vld [vmem:[%s8] sm:$0x1]
    %v564 = vlaneseq
    %v565 = vshrl.u32 %v564, 7
    %v566 = vsub.s32 0, %v565
    %v567 = vrot.slane %v562, %v566
    %v585 = vunpack.c.l.b16 %v546
    %v586 = vunpack.c.l.b16 %v547
    %v587 = vunpack.c.l.b16 %v548
    %v588 = vunpack.c.l.b16 %v549
    %v589 = vunpack.c.l.b16 %v550
    %v590 = vunpack.c.l.b16 %v551
    %v591 = vunpack.c.l.b16 %v552
    %v592 = vunpack.c.l.b16 %v553
    %v593 = vunpack.c.l.b16 %v554
    %v594 = vunpack.c.l.b16 %v555
    %v595 = vunpack.c.l.b16 %v556
    %v596 = vunpack.c.l.b16 %v557
    %v597 = vunpack.c.l.b16 %v558
    %v598 = vunpack.c.l.b16 %v559
    %v599 = vunpack.c.l.b16 %v560
    %v600 = vunpack.c.l.b16 %v561
    %v601 = vpack.c.b16 %v586, %v585
    %v602 = vpack.c.b16 %v588, %v587
    %v603 = vpack.c.b16 %v590, %v589
    %v604 = vpack.c.b16 %v592, %v591
    %v605 = vpack.c.b16 %v594, %v593
    %v606 = vpack.c.b16 %v596, %v595
    %v607 = vpack.c.b16 %v598, %v597
    %v608 = vpack.c.b16 %v600, %v599
    %617 = vmatprep.subr.bf16.mxu0 0
    %618 = vmatpush1.bf16.msra.mxu0 %v601
    %619 = vmatprep.subr.bf16.mxu0 0
    %620 = vmatpush1.bf16.msra.mxu0 %v602
    %621 = vmatprep.subr.bf16.mxu0 0
    %622 = vmatpush1.bf16.msra.mxu0 %v603
    %623 = vmatprep.subr.bf16.mxu0 0
    %624 = vmatpush1.bf16.msra.mxu0 %v604
    %625 = vmatprep.subr.bf16.mxu0 0
    %626 = vmatpush1.bf16.msra.mxu0 %v605
    %627 = vmatprep.subr.bf16.mxu0 0
    %628 = vmatpush1.bf16.msra.mxu0 %v606
    %629 = vmatprep.subr.bf16.mxu0 0
    %630 = vmatpush1.bf16.msra.mxu0 %v607
    %631 = vmatprep.subr.bf16.mxu0 0
    %632 = vmatpush1.bf16.msra.mxu0 %v608
    %633 = vmatprep.subr.bf16.mxu0 0
    %634 = vmatpush1.bf16.msra.mxu0 0
    %635 = vmatprep.subr.bf16.mxu0 0
    %636 = vmatpush1.bf16.msra.mxu0 0
    %637 = vmatprep.subr.bf16.mxu0 0
    %638 = vmatpush1.bf16.msra.mxu0 0
    %639 = vmatprep.subr.bf16.mxu0 0
    %640 = vmatpush1.bf16.msra.mxu0 0
    %641 = vmatprep.subr.bf16.mxu0 0
    %642 = vmatpush1.bf16.msra.mxu0 0
    %643 = vmatprep.subr.bf16.mxu0 0
    %644 = vmatpush1.bf16.msra.mxu0 0
    %645 = vmatprep.subr.bf16.mxu0 0
    %646 = vmatpush1.bf16.msra.mxu0 0
    %647 = vmatprep.subr.bf16.mxu0 0
    %648 = vmatpush1.bf16.msra.mxu0 0
    %649 = vmatprep.mubr.bf16.mxu0 0
    %650 = vmatmul.mubr.bf16.gmra.mrb[0].mxu0 %v545
    %v651 = vpop.f32.mrb[0].mxu0
    %v652 = vadd.f32 %v567, %v651
    %v653 = vpop.f32.mrb[0].mxu0
    %v654 = vpop.f32.mrb[0].mxu0
    %v655 = vpop.f32.mrb[0].mxu0
    %656 = vdwg.mxu0
    %v657 = vmax.f32 %v652, -100.0
    %v658 = vmin.f32 %v657, 100.0
    %659 = vst [vmem:[#allocation10] sm:$0xff] %v658
    // Predicated region
    $region54: #{tpu_custom_call.1} parent=1 // pred_check
      _
    $region55: #{tpu_custom_call.1} parent=1 // pred_check_branch
      %661 = sbr.rel (0) target = $region57
    $region56: #{tpu_custom_call.1} parent=1 // pred_region
      %s663 = ssub.s32 128, 128
      %664 = vsyncadd [#allocation4], %s663
      %s666 = sshll.u32 [#allocation10], 4
      %s667 = int_to_ptr.vmem [resolvable:$true] %s666
      %669 = dma.vmem_to_hbm [thread:$0]  %s667, 128, %s9, [#allocation4]
    $region57: #{tpu_custom_call.1} parent=1 // pred_fallthru
      _
    // Predicated region
    $region58: #{tpu_custom_call.1} parent=1 // pred_check
      _
    $region59: #{tpu_custom_call.1} parent=1 // pred_check_branch
      %671 = sbr.rel (0) target = $region61
    $region60: #{tpu_custom_call.1} parent=1 // pred_region
      %672 = dma.done [#allocation4], 128
    $region61: #{tpu_custom_call.1} parent=1 // pred_fallthru
      _
    %673 = vsyncpa [#allocation3], 1
    %674 = vsyncpa [#allocation6], 1
    %675 = vsyncpa [#allocation9], 1
    %676 = vsyncpa [#allocation4], 1

</llo_original>
